<compile_context>
chip_gen: v7x
topology: tpu7x:2x2x1
jax: 0.10.0
libtpu: 0.0.40
codegen_flags: <defaults>
</compile_context>

<pallas_src>
import functools

import jax
import jax.numpy as jnp
from jax import lax
from jax.experimental import pallas as pl
from jax.experimental.pallas import tpu as pltpu

_LANE = 128


def _round_up(x, m):
    return ((x + m - 1) // m) * m


def _num_tensorcores():
    """2 on dual-TensorCore chips (v7x), else 1 (v5e / v6e)."""
    try:
        kind = jax.devices()[0].device_kind.lower()
    except Exception:  # pragma: no cover
        return 1
    # TODO(synk): v4 / v5p are also dual-TC (megacore); left at 1 shard since
    # they are not optimization targets here and their kind strings vary.
    return 2 if ("v7" in kind or "7x" in kind) else 1


def _ppo_clip_loss_kernel(logp_ref, logp_old_ref, returns_ref, values_ref,
                          entropy_ref, out_ref, acc_ref, *,
                          eps, vf_coef, ent_coef, inv_n, n_valid, total_blocks):
    s = pl.program_id(0)
    i = pl.program_id(1)
    n_tiles = pl.num_programs(1)

    tile_rows, lane_cols = logp_ref.shape
    acc_rows = acc_ref.shape[0]

    @pl.when(i == 0)
    def _init():
        acc_ref[...] = jnp.zeros_like(acc_ref)

    # Upcast to f32 for the math / accumulation (inputs may be bf16).
    logp = logp_ref[...].astype(jnp.float32)
    logp_old = logp_old_ref[...].astype(jnp.float32)
    returns = returns_ref[...].astype(jnp.float32)
    values = values_ref[...].astype(jnp.float32)
    entropy = entropy_ref[...].astype(jnp.float32)

    ratio = jnp.exp(logp - logp_old)            # EUP
    adv = returns - values                      # forward: .detach() is identical
    clipped = jnp.clip(ratio, 1.0 - eps, 1.0 + eps)
    pg_core = jnp.minimum(ratio * adv, clipped * adv)

    # Fused weighted per-element term:
    #   -pg_core + vf_coef * 0.5 * (returns - values)^2 - ent_coef * entropy
    contrib = (0.5 * vf_coef) * (adv * adv) - pg_core - ent_coef * entropy

    def _vreg_partial(x):
        # (tile_rows, lane_cols) -> (acc_rows, lane_cols) using only VPU adds;
        # the cross-lane/sublane XLU reduce is deferred to the finalize step.
        return x.reshape(-1, acc_rows, lane_cols).sum(axis=0)

    blk = s * n_tiles + i
    tile_elems = tile_rows * lane_cols
    start = blk * tile_elems
    is_live = blk < total_blocks            # clamped duplicate blocks add 0
    is_full = (start + tile_elems) <= n_valid

    @pl.when(jnp.logical_and(is_live, is_full))
    def _accumulate_full():
        acc_ref[...] += _vreg_partial(contrib)

    @pl.when(jnp.logical_and(is_live, jnp.logical_not(is_full)))
    def _accumulate_masked():
        # Ragged tail: mask on the global element index.  Covers both the
        # grid round-up rows (OOB garbage) and any wrapper-side zero padding
        # explicitly, rather than relying on pad values contributing zero.
        ridx = lax.broadcasted_iota(jnp.int32, (tile_rows, lane_cols), 0)
        cidx = lax.broadcasted_iota(jnp.int32, (tile_rows, lane_cols), 1)
        gidx = start + ridx * lane_cols + cidx
        acc_ref[...] += _vreg_partial(jnp.where(gidx < n_valid, contrib, 0.0))

    @pl.when(i == n_tiles - 1)
    def _finalize():
        total = jnp.sum(acc_ref[...]) * inv_n
        r = lax.broadcasted_iota(jnp.int32, out_ref.shape, 0)
        c = lax.broadcasted_iota(jnp.int32, out_ref.shape, 1)
        out_ref[...] = jnp.where(jnp.logical_and(r == 0, c == 0), total, 0.0)


def ppo_clip_loss(logp, logp_old, returns, values, entropy,
                  eps=0.2, vf_coef=0.5, ent_coef=0.01,
                  *, block_elems=None, num_shards=None):
    """Scalar PPO clipped loss (forward pass), returned as a 1-tuple."""
    inputs = (logp, logp_old, returns, values, entropy)
    assert all(a.shape == logp.shape for a in inputs)
    n_elems = int(logp.size)
    assert n_elems > 0

    # Lane-dense 2-D view.  Prefer a column count that divides n_elems so the
    # reshape is a zero-copy bitcast and no padded HBM copy is materialized.
    lane_cols = None
    for cand in (4 * _LANE, 2 * _LANE, _LANE):
        if n_elems >= cand and n_elems % cand == 0:
            lane_cols = cand
            break
    if lane_cols is None:
        lane_cols = _LANE
    rows0 = pl.cdiv(n_elems, lane_cols)
    padded = rows0 * lane_cols

    def _prep(a):
        flat = jnp.ravel(a)                     # keep caller dtype through DMA
        if padded != n_elems:
            # TODO(synk): only non-128-multiple sizes pay this one small copy;
            # the <128-element tail could instead be folded in on the host.
            flat = jnp.pad(flat, (0, padded - n_elems))
        return flat.reshape(rows0, lane_cols)   # bitcast, no copy

    arrays = [_prep(a) for a in inputs]

    if num_shards is None:
        num_shards = _num_tensorcores()
    dual_core = num_shards >= 2
    # 3-deep buffering smooths the five short per-step DMAs on v7x; 2 elsewhere.
    n_buffers = 3 if dual_core else 2
    if block_elems is None:
        # ~1 MiB/input blocks on v7x (tight 64 MiB VMEM + deeper buffering),
        # ~2 MiB/input on v5e/v6e to amortize the ~0.35us per-grid-step cost.
        block_elems = (512 if dual_core else 1024) * 512

    if rows0 <= 8:
        tile_rows = rows0
    else:
        tile_rows = min(_round_up(pl.cdiv(rows0, num_shards), 8),
                        max(8, block_elems // lane_cols))
    total_blocks = pl.cdiv(rows0, tile_rows)
    num_shards = max(1, min(num_shards, total_blocks))
    n_tiles = pl.cdiv(total_blocks, num_shards)
    acc_rows = 8 if tile_rows % 8 == 0 else tile_rows

    def in_index_map(s, i, _nt=n_tiles, _last=total_blocks - 1):
        # Clamp so trailing grid steps of the last shard re-read an in-bounds
        # block; the kernel zeroes their contribution (blk >= total_blocks).
        return (jnp.minimum(s * _nt + i, _last), 0)

    kernel = functools.partial(
        _ppo_clip_loss_kernel,
        eps=float(eps), vf_coef=float(vf_coef), ent_coef=float(ent_coef),
        inv_n=1.0 / float(n_elems), n_valid=n_elems,
        total_blocks=int(total_blocks))

    block_bytes = sum(tile_rows * lane_cols * a.dtype.itemsize for a in arrays)
    # Cap at 48 MiB (v7x has only 64 MiB physical VMEM; leave Mosaic internal
    # headroom); +16 MiB covers compiler temporaries of the elementwise chain.
    vmem_limit = int(min(48 << 20,
                         max(16 << 20, n_buffers * block_bytes + (16 << 20))))

    def _run(extra_buffering):
        if extra_buffering:
            in_specs = [pl.BlockSpec((tile_rows, lane_cols), in_index_map,
                                     pipeline_mode=pl.Buffered(n_buffers))
                        for _ in arrays]
        else:
            in_specs = [pl.BlockSpec((tile_rows, lane_cols), in_index_map)
                        for _ in arrays]
        return pl.pallas_call(
            kernel,
            out_shape=jax.ShapeDtypeStruct((num_shards * 8, _LANE), jnp.float32),
            grid_spec=pltpu.PrefetchScalarGridSpec(
                num_scalar_prefetch=0,
                grid=(num_shards, n_tiles),
                in_specs=in_specs,
                out_specs=pl.BlockSpec((8, _LANE), lambda s, i: (s, 0)),
                scratch_shapes=[pltpu.VMEM((acc_rows, lane_cols), jnp.float32)],
            ),
            compiler_params=pltpu.CompilerParams(
                dimension_semantics=("parallel", "arbitrary"),
                vmem_limit_bytes=vmem_limit),
        )(*arrays)

    # TODO(synk): forward-only; wrap in jax.custom_vjp if differentiation is
    # ever required so `values` is stop_gradient'ed in the advantage term.
    if n_buffers > 2:
        try:
            return (jnp.sum(_run(True)),)
        except Exception:  # pragma: no cover - Pallas build without pl.Buffered
            pass
    return (jnp.sum(_run(False)),)


def _reference(logp, logp_old, returns, values, entropy,
               eps=0.2, vf_coef=0.5, ent_coef=0.01):
    f32 = lambda a: jnp.asarray(a, jnp.float32)
    logp, logp_old, returns, values, entropy = map(
        f32, (logp, logp_old, returns, values, entropy))
    ratio = jnp.exp(logp - logp_old)
    adv = returns - values
    pg_core = jnp.minimum(ratio * adv,
                          jnp.clip(ratio, 1 - eps, 1 + eps) * adv)
    policy_loss = -jnp.mean(pg_core)
    value_loss = 0.5 * jnp.mean((returns - values) ** 2)
    ent_loss = -jnp.mean(entropy)
    return policy_loss + vf_coef * value_loss + ent_coef * ent_loss


if __name__ == "__main__":
    key = jax.random.PRNGKey(0)

    def make_inputs(shape, dtype):
        k1, k2, k3, k4, k5 = jax.random.split(key, 5)
        logp = (jax.random.normal(k1, shape, jnp.float32) * 0.1).astype(dtype)
        logp_old = (jax.random.normal(k2, shape, jnp.float32) * 0.1).astype(dtype)
        returns = jax.random.normal(k3, shape, jnp.float32).astype(dtype)
        values = jax.random.normal(k4, shape, jnp.float32).astype(dtype)
        entropy = jax.nn.softplus(
            jax.random.normal(k5, shape, jnp.float32)).astype(dtype)
        return logp, logp_old, returns, values, entropy

    def check(args, ref_tol, **kw):
        (loss,) = ppo_clip_loss(*args, **kw)
        loss = jax.block_until_ready(loss)
        ref = _reference(*args)
        assert jnp.allclose(loss, ref, rtol=ref_tol, atol=ref_tol), (loss, ref)

    # 1. Lane-aligned case: zero-copy reshape, single full tile.
    check(make_inputs((8, 128), jnp.float32), 1e-5)

    # 2. Odd shape: exercises the minimal-pad path + explicit in-kernel mask.
    check(make_inputs((5, 37), jnp.float32), 1e-5)

    # 3. Forced tiny tiles + 2 shards: exercises multi-tile accumulation, the
    #    partially-valid (masked) last block and a clamped dead block.
    check(make_inputs((64, 160), jnp.float32), 1e-5,
          block_elems=8 * 512, num_shards=2)

    # 4. bf16 inputs end-to-end (half the HBM bytes), f32 math inside.
    check(make_inputs((16, 256), jnp.bfloat16), 1e-4)

    print("KERNEL_OK")
</pallas_src>

<mosaic_0001>
module attributes {stable_mosaic.version = 11 : i64} {
  func.func @_ppo_clip_loss_kernel(%arg0: i32, %arg1: i32, %arg2: memref<2x512xf32, #tpu.memory_space<vmem>>, %arg3: memref<2x512xf32, #tpu.memory_space<vmem>>, %arg4: memref<2x512xf32, #tpu.memory_space<vmem>>, %arg5: memref<2x512xf32, #tpu.memory_space<vmem>>, %arg6: memref<2x512xf32, #tpu.memory_space<vmem>>, %arg7: memref<8x128xf32, #tpu.memory_space<vmem>>, %arg8: memref<2x512xf32, #tpu.memory_space<vmem>>) attributes {dimension_semantics = [#tpu.dimension_semantics<parallel>, #tpu.dimension_semantics<arbitrary>], iteration_bounds = array<i64: 1, 1>, scalar_prefetch = 0 : i64, scratch_operands = 1 : i64, tpu.core_type = #tpu.core_type<tc>, window_params = [{transform_indices = @transform_0, window_bounds = array<i64: 2, 512>}, {transform_indices = @transform_1, window_bounds = array<i64: 2, 512>}, {transform_indices = @transform_2, window_bounds = array<i64: 2, 512>}, {transform_indices = @transform_3, window_bounds = array<i64: 2, 512>}, {transform_indices = @transform_4, window_bounds = array<i64: 2, 512>}, {transform_indices = @transform_5, window_bounds = array<i64: 8, 128>}]} {
    %c0_i32 = arith.constant 0 : i32
    %0 = arith.cmpi eq, %arg1, %c0_i32 : i32
    %1 = arith.extui %0 : i1 to i32
    %c0_i32_0 = arith.constant 0 : i32
    %2 = arith.cmpi ne, %1, %c0_i32_0 : i32
    scf.if %2 {
      %cst_20 = arith.constant 0.000000e+00 : f32
      %41 = vector.broadcast %cst_20 : f32 to vector<2x512xf32>
      %c0_21 = arith.constant 0 : index
      %c0_22 = arith.constant 0 : index
      %42 = vector.load %arg8[%c0_21, %c0_22] : memref<2x512xf32, #tpu.memory_space<vmem>>, vector<2x512xf32>
      tpu.vector_store %arg8[%c0_21, %c0_22], %41 {strides = array<i32>} : memref<2x512xf32, #tpu.memory_space<vmem>>, vector<2x512xf32>,
    } else {
    }
    %c0 = arith.constant 0 : index
    %c0_1 = arith.constant 0 : index
    %3 = vector.load %arg2[%c0, %c0_1] : memref<2x512xf32, #tpu.memory_space<vmem>>, vector<2x512xf32>
    %c0_2 = arith.constant 0 : index
    %c0_3 = arith.constant 0 : index
    %4 = vector.load %arg3[%c0_2, %c0_3] : memref<2x512xf32, #tpu.memory_space<vmem>>, vector<2x512xf32>
    %c0_4 = arith.constant 0 : index
    %c0_5 = arith.constant 0 : index
    %5 = vector.load %arg4[%c0_4, %c0_5] : memref<2x512xf32, #tpu.memory_space<vmem>>, vector<2x512xf32>
    %c0_6 = arith.constant 0 : index
    %c0_7 = arith.constant 0 : index
    %6 = vector.load %arg5[%c0_6, %c0_7] : memref<2x512xf32, #tpu.memory_space<vmem>>, vector<2x512xf32>
    %c0_8 = arith.constant 0 : index
    %c0_9 = arith.constant 0 : index
    %7 = vector.load %arg6[%c0_8, %c0_9] : memref<2x512xf32, #tpu.memory_space<vmem>>, vector<2x512xf32>
    %8 = arith.subf %3, %4 : vector<2x512xf32>
    %9 = math.exp %8 : vector<2x512xf32>
    %10 = arith.subf %5, %6 : vector<2x512xf32>
    %cst = arith.constant 8.000000e-01 : f32
    %cst_10 = arith.constant 1.200000e+00 : f32
    %11 = vector.broadcast %cst : f32 to vector<2x512xf32>
    %12 = arith.maximumf %11, %9 : vector<2x512xf32>
    %13 = vector.broadcast %cst_10 : f32 to vector<2x512xf32>
    %14 = arith.minimumf %13, %12 : vector<2x512xf32>
    %15 = arith.mulf %9, %10 : vector<2x512xf32>
    %16 = arith.mulf %14, %10 : vector<2x512xf32>
    %17 = arith.minimumf %15, %16 : vector<2x512xf32>
    %18 = arith.mulf %10, %10 : vector<2x512xf32>
    %cst_11 = arith.constant 2.500000e-01 : f32
    %19 = vector.broadcast %cst_11 : f32 to vector<2x512xf32>
    %20 = arith.mulf %19, %18 : vector<2x512xf32>
    %21 = arith.subf %20, %17 : vector<2x512xf32>
    %cst_12 = arith.constant 0.00999999977 : f32
    %22 = vector.broadcast %cst_12 : f32 to vector<2x512xf32>
    %23 = arith.mulf %22, %7 : vector<2x512xf32>
    %24 = arith.subf %21, %23 : vector<2x512xf32>
    %c1_i32 = arith.constant 1 : i32
    %25 = arith.muli %arg0, %c1_i32 : i32
    %26 = arith.addi %25, %arg1 : i32
    %c1024_i32 = arith.constant 1024 : i32
    %27 = arith.muli %26, %c1024_i32 : i32
    %c1_i32_13 = arith.constant 1 : i32
    %28 = arith.cmpi slt, %26, %c1_i32_13 : i32
    %c1024_i32_14 = arith.constant 1024 : i32
    %29 = arith.addi %27, %c1024_i32_14 : i32
    %c1024_i32_15 = arith.constant 1024 : i32
    %30 = arith.cmpi sle, %29, %c1024_i32_15 : i32
    %31 = arith.andi %28, %30 : i1
    %32 = arith.extui %31 : i1 to i32
    %c0_i32_16 = arith.constant 0 : i32
    %33 = arith.cmpi ne, %32, %c0_i32_16 : i32
    scf.if %33 {
      %c0_20 = arith.constant 0 : index
      %c0_21 = arith.constant 0 : index
      %41 = vector.load %arg8[%c0_20, %c0_21] : memref<2x512xf32, #tpu.memory_space<vmem>>, vector<2x512xf32>
      %42 = vector.shape_cast %24 : vector<2x512xf32> to vector<1x2x512xf32>
      %cst_22 = arith.constant dense<0.000000e+00> : vector<2x512xf32>
      %43 = vector.multi_reduction <add>, %42, %cst_22 [0] : vector<1x2x512xf32> to vector<2x512xf32>
      %44 = arith.addf %41, %43 : vector<2x512xf32>
      %c0_23 = arith.constant 0 : index
      %c0_24 = arith.constant 0 : index
      %45 = vector.load %arg8[%c0_23, %c0_24] : memref<2x512xf32, #tpu.memory_space<vmem>>, vector<2x512xf32>
      tpu.vector_store %arg8[%c0_23, %c0_24], %44 {strides = array<i32>} : memref<2x512xf32, #tpu.memory_space<vmem>>, vector<2x512xf32>,
    } else {
    }
    %true = arith.constant true
    %34 = arith.xori %30, %true : i1
    %35 = arith.andi %28, %34 : i1
    %36 = arith.extui %35 : i1 to i32
    %c0_i32_17 = arith.constant 0 : i32
    %37 = arith.cmpi ne, %36, %c0_i32_17 : i32
    scf.if %37 {
      %41 = tpu.iota {dimensions = array<i32: 0>} : vector<2x512xi32>
      %42 = tpu.iota {dimensions = array<i32: 1>} : vector<2x512xi32>
      %c512_i32 = arith.constant 512 : i32
      %43 = vector.broadcast %c512_i32 : i32 to vector<2x512xi32>
      %44 = arith.muli %41, %43 : vector<2x512xi32>
      %45 = vector.broadcast %27 : i32 to vector<2x512xi32>
      %46 = arith.addi %45, %44 : vector<2x512xi32>
      %47 = arith.addi %46, %42 : vector<2x512xi32>
      %c0_20 = arith.constant 0 : index
      %c0_21 = arith.constant 0 : index
      %48 = vector.load %arg8[%c0_20, %c0_21] : memref<2x512xf32, #tpu.memory_space<vmem>>, vector<2x512xf32>
      %c1024_i32_22 = arith.constant 1024 : i32
      %49 = vector.broadcast %c1024_i32_22 : i32 to vector<2x512xi32>
      %50 = arith.cmpi slt, %47, %49 : vector<2x512xi32>
      %cst_23 = arith.constant 0.000000e+00 : f32
      %51 = vector.broadcast %cst_23 : f32 to vector<2x512xf32>
      %52 = arith.select %50, %24, %51 : vector<2x512xi1>, vector<2x512xf32>
      %53 = vector.shape_cast %52 : vector<2x512xf32> to vector<1x2x512xf32>
      %cst_24 = arith.constant dense<0.000000e+00> : vector<2x512xf32>
      %54 = vector.multi_reduction <add>, %53, %cst_24 [0] : vector<1x2x512xf32> to vector<2x512xf32>
      %55 = arith.addf %48, %54 : vector<2x512xf32>
      %c0_25 = arith.constant 0 : index
      %c0_26 = arith.constant 0 : index
      %56 = vector.load %arg8[%c0_25, %c0_26] : memref<2x512xf32, #tpu.memory_space<vmem>>, vector<2x512xf32>
      tpu.vector_store %arg8[%c0_25, %c0_26], %55 {strides = array<i32>} : memref<2x512xf32, #tpu.memory_space<vmem>>, vector<2x512xf32>,
    } else {
    }
    %c0_i32_18 = arith.constant 0 : i32
    %38 = arith.cmpi eq, %arg1, %c0_i32_18 : i32
    %39 = arith.extui %38 : i1 to i32
    %c0_i32_19 = arith.constant 0 : i32
    %40 = arith.cmpi ne, %39, %c0_i32_19 : i32
    scf.if %40 {
      %c0_20 = arith.constant 0 : index
      %c0_21 = arith.constant 0 : index
      %41 = vector.load %arg8[%c0_20, %c0_21] : memref<2x512xf32, #tpu.memory_space<vmem>>, vector<2x512xf32>
      %42 = vector.shape_cast %41 : vector<2x512xf32> to vector<1x2x512xf32>
      %cst_22 = arith.constant dense<0.000000e+00> : vector<1xf32>
      %43 = vector.multi_reduction <add>, %42, %cst_22 [1, 2] : vector<1x2x512xf32> to vector<1xf32>
      %44 = vector.shape_cast %43 : vector<1xf32> to vector<1x1x1xf32>
      %45 = vector.extract %44[0, 0, 0] : f32 from vector<1x1x1xf32>
      %cst_23 = arith.constant 9.765625E-4 : f32
      %46 = arith.mulf %45, %cst_23 : f32
      %47 = tpu.iota {dimensions = array<i32: 0>} : vector<8x128xi32>
      %48 = tpu.iota {dimensions = array<i32: 1>} : vector<8x128xi32>
      %c0_i32_24 = arith.constant 0 : i32
      %49 = vector.broadcast %c0_i32_24 : i32 to vector<8x128xi32>
      %50 = arith.cmpi eq, %47, %49 : vector<8x128xi32>
      %c0_i32_25 = arith.constant 0 : i32
      %51 = vector.broadcast %c0_i32_25 : i32 to vector<8x128xi32>
      %52 = arith.cmpi eq, %48, %51 : vector<8x128xi32>
      %53 = arith.andi %50, %52 : vector<8x128xi1>
      %cst_26 = arith.constant 0.000000e+00 : f32
      %54 = vector.broadcast %46 : f32 to vector<8x128xf32>
      %55 = vector.broadcast %cst_26 : f32 to vector<8x128xf32>
      %56 = arith.select %53, %54, %55 : vector<8x128xi1>, vector<8x128xf32>
      %c0_27 = arith.constant 0 : index
      %c0_28 = arith.constant 0 : index
      %57 = vector.load %arg7[%c0_27, %c0_28] : memref<8x128xf32, #tpu.memory_space<vmem>>, vector<8x128xf32>
      tpu.vector_store %arg7[%c0_27, %c0_28], %56 {strides = array<i32>} : memref<8x128xf32, #tpu.memory_space<vmem>>, vector<8x128xf32>,
    } else {
    }
    return
  }
  func.func @transform_0(%arg0: i32, %arg1: i32) -> (i32, i32) {
    %c1_i32 = arith.constant 1 : i32
    %0 = arith.muli %arg0, %c1_i32 : i32
    %1 = arith.addi %0, %arg1 : i32
    %c0_i32 = arith.constant 0 : i32
    %2 = arith.minsi %1, %c0_i32 : i32
    %c0_i32_0 = arith.constant 0 : i32
    %c0_i32_1 = arith.constant 0 : i32
    return %2, %c0_i32_0 : i32, i32
  }
  func.func @transform_1(%arg0: i32, %arg1: i32) -> (i32, i32) {
    %c1_i32 = arith.constant 1 : i32
    %0 = arith.muli %arg0, %c1_i32 : i32
    %1 = arith.addi %0, %arg1 : i32
    %c0_i32 = arith.constant 0 : i32
    %2 = arith.minsi %1, %c0_i32 : i32
    %c0_i32_0 = arith.constant 0 : i32
    %c0_i32_1 = arith.constant 0 : i32
    return %2, %c0_i32_0 : i32, i32
  }
  func.func @transform_2(%arg0: i32, %arg1: i32) -> (i32, i32) {
    %c1_i32 = arith.constant 1 : i32
    %0 = arith.muli %arg0, %c1_i32 : i32
    %1 = arith.addi %0, %arg1 : i32
    %c0_i32 = arith.constant 0 : i32
    %2 = arith.minsi %1, %c0_i32 : i32
    %c0_i32_0 = arith.constant 0 : i32
    %c0_i32_1 = arith.constant 0 : i32
    return %2, %c0_i32_0 : i32, i32
  }
  func.func @transform_3(%arg0: i32, %arg1: i32) -> (i32, i32) {
    %c1_i32 = arith.constant 1 : i32
    %0 = arith.muli %arg0, %c1_i32 : i32
    %1 = arith.addi %0, %arg1 : i32
    %c0_i32 = arith.constant 0 : i32
    %2 = arith.minsi %1, %c0_i32 : i32
    %c0_i32_0 = arith.constant 0 : i32
    %c0_i32_1 = arith.constant 0 : i32
    return %2, %c0_i32_0 : i32, i32
  }
  func.func @transform_4(%arg0: i32, %arg1: i32) -> (i32, i32) {
    %c1_i32 = arith.constant 1 : i32
    %0 = arith.muli %arg0, %c1_i32 : i32
    %1 = arith.addi %0, %arg1 : i32
    %c0_i32 = arith.constant 0 : i32
    %2 = arith.minsi %1, %c0_i32 : i32
    %c0_i32_0 = arith.constant 0 : i32
    %c0_i32_1 = arith.constant 0 : i32
    return %2, %c0_i32_0 : i32, i32
  }
  func.func @transform_5(%arg0: i32, %arg1: i32) -> (i32, i32) {
    %c0_i32 = arith.constant 0 : i32
    %c0_i32_0 = arith.constant 0 : i32
    return %arg0, %c0_i32 : i32, i32
  }
}

</mosaic_0001>

<llo_original>
// kernel: tpu_custom_call.1
$region0: #{tpu_custom_call.1}
  #allocation0 [shape = 'u32[]', space=smem, size = 0x4, offset = 0x4, fixed_abs, tag = 'smem constant byte address 0x4 - core index']
  #allocation1 [shape = 'u32[144,128]{1,0:T(1,128)}', space=vmem, size = 0x12000, scoped, tag = 'internal scratch']
  #allocation2 [shape = 'f32[2,512]{1,0:T(2,128)}', space=vmem, size = 0x1000, scoped, tag = 'scratch operand']
  %s0 = inlined_call_operand.hbm [shape: f32[2,512], index: 0, kind: input, shape index: {}]
  %s1 = inlined_call_operand.hbm [shape: f32[2,512], index: 1, kind: input, shape index: {}]
  %s2 = inlined_call_operand.hbm [shape: f32[2,512], index: 2, kind: input, shape index: {}]
  %s3 = inlined_call_operand.vmem [shape: f32[2,512], index: 3, kind: input, shape index: {}]
  %s4 = inlined_call_operand.hbm [shape: f32[2,512], index: 4, kind: input, shape index: {}]
  %s5 = inlined_call_operand.hbm [shape: f32[8,128], index: 5, kind: output, shape index: {}]
  %s6 = sld [smem:[#allocation0]]
  $region62: #{tpu_custom_call.1} parent=0
    _
  %s8 = ssub.s32 1, %s6
  %s9 = scalar_select 0, %s8, %s6
  $region1: #{tpu_custom_call.1} parent=0
    #allocation3 [shape = 'u8[4096]{0}', space=vmem, size = 0x1000, scoped, tag = 'input window, operand 0, single buffered']
    #allocation4 [shape = 's32[1]{0}', space=sflag, size = 0x4, scoped, tag = 'scoped memory for tpu_custom_call.1']
    #allocation5 [shape = 's32[1]{0}', space=sflag, size = 0x4, scoped, tag = 'scoped memory for tpu_custom_call.1']
    #allocation6 [shape = 'u8[4096]{0}', space=vmem, size = 0x1000, scoped, tag = 'input window, operand 1, single buffered']
    #allocation7 [shape = 's32[1]{0}', space=sflag, size = 0x4, scoped, tag = 'scoped memory for tpu_custom_call.1']
    #allocation8 [shape = 'u8[4096]{0}', space=vmem, size = 0x1000, scoped, tag = 'input window, operand 2, single buffered']
    #allocation9 [shape = 'u8[4096]{0}', space=vmem, size = 0x1000, scoped, tag = 'input window, operand 4, single buffered']
    #allocation10 [shape = 's32[1]{0}', space=sflag, size = 0x4, scoped, tag = 'scoped memory for tpu_custom_call.1']
    #allocation11 [shape = 'u8[4096]{0}', space=vmem, size = 0x1000, scoped, tag = 'output window, operand 0, single buffered']
    %10 = vsyncpa [#allocation4], 0
    %11 = vsyncpa [#allocation7], 0
    %12 = vsyncpa [#allocation10], 0
    %13 = vsyncpa [#allocation5], 0
    // Predicated region
    $region2: #{tpu_custom_call.1} parent=1 // pred_check
      _
    $region3: #{tpu_custom_call.1} parent=1 // pred_check_branch
      %15 = sbr.rel (0) target = $region5
    $region4: #{tpu_custom_call.1} parent=1 // pred_region
      %s16 = sadd.s32 0, 0
      %p17 = scmp.lt.s32.totalorder %s16, 0
      %s18 = scalar_select %p17, %s16, 0
      %s20 = ssub.s32 128, 128
      %21 = vsyncadd [#allocation4], %s20
      %s22 = smul.addr %s18, 4
      %s23 = smul.addr %s22, 32
      %s24 = scalar_lea.hbm %s0, %s23
      %s26 = sshll.u32 [#allocation3], 4
      %s27 = int_to_ptr.vmem [resolvable:$true] %s26
      %29 = dma.hbm_to_vmem [thread:$0]  %s24, 128, %s27, [#allocation4]
    $region5: #{tpu_custom_call.1} parent=1 // pred_fallthru
      _
    // Predicated region
    $region6: #{tpu_custom_call.1} parent=1 // pred_check
      _
    $region7: #{tpu_custom_call.1} parent=1 // pred_check_branch
      %31 = sbr.rel (0) target = $region9
    $region8: #{tpu_custom_call.1} parent=1 // pred_region
      %s32 = sadd.s32 0, 0
      %p33 = scmp.lt.s32.totalorder %s32, 0
      %s34 = scalar_select %p33, %s32, 0
      %s36 = ssub.s32 128, 128
      %37 = vsyncadd [#allocation7], %s36
      %s38 = smul.addr %s34, 4
      %s39 = smul.addr %s38, 32
      %s40 = scalar_lea.hbm %s1, %s39
      %s42 = sshll.u32 [#allocation6], 4
      %s43 = int_to_ptr.vmem [resolvable:$true] %s42
      %45 = dma.hbm_to_vmem [thread:$0]  %s40, 128, %s43, [#allocation7]
    $region9: #{tpu_custom_call.1} parent=1 // pred_fallthru
      _
    // Predicated region
    $region10: #{tpu_custom_call.1} parent=1 // pred_check
      _
    $region11: #{tpu_custom_call.1} parent=1 // pred_check_branch
      %47 = sbr.rel (0) target = $region13
    $region12: #{tpu_custom_call.1} parent=1 // pred_region
      %s48 = sadd.s32 0, 0
      %p49 = scmp.lt.s32.totalorder %s48, 0
      %s50 = scalar_select %p49, %s48, 0
      %s52 = ssub.s32 128, 128
      %53 = vsyncadd [#allocation7], %s52
      %s54 = smul.addr %s50, 4
      %s55 = smul.addr %s54, 32
      %s56 = scalar_lea.hbm %s2, %s55
      %s58 = sshll.u32 [#allocation8], 4
      %s59 = int_to_ptr.vmem [resolvable:$true] %s58
      %61 = dma.hbm_to_vmem [thread:$0]  %s56, 128, %s59, [#allocation7]
    $region13: #{tpu_custom_call.1} parent=1 // pred_fallthru
      _
    // Predicated region
    $region14: #{tpu_custom_call.1} parent=1 // pred_check
      _
    $region15: #{tpu_custom_call.1} parent=1 // pred_check_branch
      %63 = sbr.rel (0) target = $region17
    $region16: #{tpu_custom_call.1} parent=1 // pred_region
      %s64 = sadd.s32 0, 0
      %p65 = scmp.lt.s32.totalorder %s64, 0
      %s66 = scalar_select %p65, %s64, 0
      %p67 = scmp.lt.s32.totalorder %s66, 0
      %s68 = scalar_select %p67, %s66, 0
      %s69 = smul.addr %s68, 4
      %s70 = smul.addr %s69, 2
      %s71 = scalar_lea.vmem %s3, %s70
      %s72 = sadd.s32 0, 0
      %p73 = scmp.lt.s32.totalorder %s72, 0
      %s74 = scalar_select %p73, %s72, 0
    $region17: #{tpu_custom_call.1} parent=1 // pred_fallthru
      _
    // Predicated region
    $region18: #{tpu_custom_call.1} parent=1 // pred_check
      _
    $region19: #{tpu_custom_call.1} parent=1 // pred_check_branch
      %76 = sbr.rel (0) target = $region21
    $region20: #{tpu_custom_call.1} parent=1 // pred_region
      %s77 = sadd.s32 0, 0
      %p78 = scmp.lt.s32.totalorder %s77, 0
      %s79 = scalar_select %p78, %s77, 0
      %s81 = ssub.s32 128, 128
      %82 = vsyncadd [#allocation10], %s81
      %s83 = smul.addr %s79, 4
      %s84 = smul.addr %s83, 32
      %s85 = scalar_lea.hbm %s4, %s84
      %s87 = sshll.u32 [#allocation9], 4
      %s88 = int_to_ptr.vmem [resolvable:$true] %s87
      %90 = dma.hbm_to_vmem [thread:$0]  %s85, 128, %s88, [#allocation10]
    $region21: #{tpu_custom_call.1} parent=1 // pred_fallthru
      _
    // Predicated region
    $region22: #{tpu_custom_call.1} parent=1 // pred_check
      _
    $region23: #{tpu_custom_call.1} parent=1 // pred_check_branch
      %92 = sbr.rel (0) target = $region25
    $region24: #{tpu_custom_call.1} parent=1 // pred_region
      %93 = dma.done [#allocation4], 128
    $region25: #{tpu_custom_call.1} parent=1 // pred_fallthru
      _
    // Predicated region
    $region26: #{tpu_custom_call.1} parent=1 // pred_check
      _
    $region27: #{tpu_custom_call.1} parent=1 // pred_check_branch
      %95 = sbr.rel (0) target = $region29
    $region28: #{tpu_custom_call.1} parent=1 // pred_region
      %96 = dma.done [#allocation7], 128
    $region29: #{tpu_custom_call.1} parent=1 // pred_fallthru
      _
    // Predicated region
    $region30: #{tpu_custom_call.1} parent=1 // pred_check
      _
    $region31: #{tpu_custom_call.1} parent=1 // pred_check_branch
      %98 = sbr.rel (0) target = $region33
    $region32: #{tpu_custom_call.1} parent=1 // pred_region
      %99 = dma.done [#allocation7], 128
    $region33: #{tpu_custom_call.1} parent=1 // pred_fallthru
      _
    // Predicated region
    $region34: #{tpu_custom_call.1} parent=1 // pred_check
      _
    $region35: #{tpu_custom_call.1} parent=1 // pred_check_branch
      %101 = sbr.rel (0) target = $region37
    $region36: #{tpu_custom_call.1} parent=1 // pred_region
      %102 = dma.done [#allocation10], 128
    $region37: #{tpu_custom_call.1} parent=1 // pred_fallthru
      _
    %s103 = sadd.s32 0, 0
    %p104 = scmp.lt.s32.totalorder %s103, 0
    %s105 = scalar_select %p104, %s103, 0
    %p106 = scmp.lt.s32.totalorder %s105, 0
    %s107 = scalar_select %p106, %s105, 0
    %s108 = smul.addr %s107, 4
    %s109 = smul.addr %s108, 2
    %s110 = scalar_lea.vmem %s3, %s109
    %s111 = sadd.s32 0, 0
    %p112 = scmp.lt.s32.totalorder %s111, 0
    %s113 = scalar_select %p112, %s111, 0
    %s114 = sadd.s32 0, 0
    %p115 = scmp.lt.s32.totalorder %s114, 0
    %s116 = scalar_select %p115, %s114, 0
    %s117 = sadd.s32 0, 0
    %p118 = scmp.lt.s32.totalorder %s117, 0
    %s119 = scalar_select %p118, %s117, 0
    %s120 = sadd.s32 0, 0
    %p121 = scmp.lt.s32.totalorder %s120, 0
    %s122 = scalar_select %p121, %s120, 0
    %p123 = scmp.lt.s32.totalorder %s122, 0
    %s124 = scalar_select %p123, %s122, 0
    %s125 = smul.addr %s124, 4
    %s126 = smul.addr %s125, 2
    %s127 = scalar_lea.vmem %s3, %s126
    %s128 = sadd.s32 0, 0
    %p129 = scmp.lt.s32.totalorder %s128, 0
    %s130 = scalar_select %p129, %s128, 0
    %s131 = sadd.s32 0, 0
    %p132 = scmp.lt.s32.totalorder %s131, 0
    %s133 = scalar_select %p132, %s131, 0
    %p134 = scmp.eq.s32.totalorder 0, 0
    // Predicated region
    $region38: #{tpu_custom_call.1} parent=1 // pred_check
      %p135 = pneg %p134
    $region39: #{tpu_custom_call.1} parent=1 // pred_check_branch
      %137 = sbr.rel (%p135) target = $region41
    $region40: #{tpu_custom_call.1} parent=1 // pred_region
      %138 = vst [vmem:[#allocation2] sm:$0xff] 0.0
    $region41: #{tpu_custom_call.1} parent=1 // pred_fallthru
      _
    %v139 = vld [vmem:[#allocation3] sm:$0xff]
    %v140 = vld [vmem:[#allocation6] sm:$0xff]
    %v141 = vld [vmem:[#allocation8] sm:$0xff]
    %v142 = vld [vmem:[%s127] sm:$0xff]
    %v143 = vld [vmem:[#allocation9] sm:$0xff]
    %v144 = vsub.f32 %v139, %v140
    %v145 = vmul.f32 %v144, 1.442695
    %v146 = vpow.pop %v145
    %v147 = vsub.f32 %v141, %v142
    %v148 = vmax.f32 %v146, 0.8
    %v149 = vmin.f32 %v148, 1.2
    %v150 = vmul.f32 %v146, %v147
    %v151 = vmul.f32 %v149, %v147
    %v152 = vmin.f32 %v150, %v151
    %v153 = vmul.f32 %v147, %v147
    %v154 = vmul.f32 %v153, 0.25
    %v155 = vsub.f32 %v154, %v152
    %v156 = vmul.f32 %v143, 0.01
    %v157 = vsub.f32 %v155, %v156
    %s158 = sadd.s32 0, 0
    %s159 = smul.u32 %s158, 1024
    %p160 = scmp.lt.s32.totalorder %s158, 1
    %s161 = sadd.s32 %s159, 1024
    %p162 = scmp.le.s32.totalorder %s161, 1024
    %p163 = pnand %p160, %p162
    %p164 = pneg %p163
    // Predicated region
    $region42: #{tpu_custom_call.1} parent=1 // pred_check
      _
    $region43: #{tpu_custom_call.1} parent=1 // pred_check_branch
      %166 = sbr.rel (%p163) target = $region45
    $region44: #{tpu_custom_call.1} parent=1 // pred_region
      %v167 = vld [vmem:[#allocation2] sm:$0xff]
      %v168 = vadd.f32 %v157, 0.0
      %v169 = vadd.f32 %v167, %v168
      %170 = vst [vmem:[#allocation2] sm:$0xff] %v169
    $region45: #{tpu_custom_call.1} parent=1 // pred_fallthru
      _
    %p171 = scmp.gt.s32.totalorder %s161, 1024
    %p172 = pnand %p160, %p171
    %p173 = pneg %p172
    // Predicated region
    $region46: #{tpu_custom_call.1} parent=1 // pred_check
      _
    $region47: #{tpu_custom_call.1} parent=1 // pred_check_branch
      %175 = sbr.rel (%p172) target = $region49
    $region48: #{tpu_custom_call.1} parent=1 // pred_region
      %v176 = vlaneseq
      %v177 = vshrl.u32 %v176, 7
      %v178 = vlaneseq
      %v179 = vand.u32 %v178, 127
      %v180 = vadd.s32 %v179, 128
      %v181 = vadd.s32 %v179, 256
      %v182 = vadd.s32 %v179, 384
      %v183 = vmul.u32 %v177, 512
      %v184 = vstv %s159
      %v185 = vadd.s32 %v184, %v183
      %v186 = vadd.s32 %v185, %v179
      %v187 = vadd.s32 %v185, %v180
      %v188 = vadd.s32 %v185, %v181
      %v189 = vadd.s32 %v185, %v182
      %v190 = vld [vmem:[#allocation2] sm:$0xff]
      %vm191 = vcmp.lt.s32.totalorder %v186, 1024
      %vm192 = vcmp.lt.s32.totalorder %v187, 1024
      %vm193 = vcmp.lt.s32.totalorder %v188, 1024
      %vm194 = vcmp.lt.s32.totalorder %v189, 1024
      %v196 = vcombine.high %v157, %v157
      %v198 = vunpack.c.l.s4 1983009808
      %v199 = vunpack.c.0.s8 %v198
      %v200 = vlaneseq
      %v201 = vshrl.u32 %v200, 7
      %v202 = vsub.s32 %v199, %v201
      %v203 = vrot.slane %v157, %v202
      %v205 = vunpack.c.l.s4 1983009808
      %v206 = vunpack.c.0.s8 %v205
      %v207 = vlaneseq
      %v208 = vshrl.u32 %v207, 7
      %v209 = vsub.s32 %v206, %v208
      %v210 = vrot.slane %v196, %v209
      %v211 = vcombine.high %v203, %v203
      %v212 = vcombine.high %v210, %v210
      %v217 = vsel %vm191, %v203, 0.0
      %v218 = vsel %vm192, %v211, 0.0
      %v219 = vsel %vm193, %v210, 0.0
      %v220 = vsel %vm194, %v212, 0.0
      %v221 = vadd.f32 %v217, 0.0
      %v222 = vadd.f32 %v218, 0.0
      %v223 = vadd.f32 %v219, 0.0
      %v224 = vadd.f32 %v220, 0.0
      %v229 = vcombine.low %v221, %v222
      %v230 = vcombine.low %v223, %v224
      %v232 = vunpack.c.l.s4 1983009808
      %v233 = vunpack.c.0.s8 %v232
      %v234 = vlaneseq
      %v235 = vshrl.u32 %v234, 7
      %v236 = vsub.s32 %v233, %v235
      %v237 = vrot.slane %v229, %v236
      %v239 = vunpack.c.l.s4 1983009808
      %v240 = vunpack.c.0.s8 %v239
      %v241 = vlaneseq
      %v242 = vshrl.u32 %v241, 7
      %v243 = vsub.s32 %v240, %v242
      %v244 = vrot.slane %v230, %v243
      %v245 = vcombine.low %v237, %v244
      %v247 = vadd.f32 %v190, %v245
      %248 = vst [vmem:[#allocation2] sm:$0xff] %v247
    $region49: #{tpu_custom_call.1} parent=1 // pred_fallthru
      _
    // Predicated region
    $region50: #{tpu_custom_call.1} parent=1 // pred_check
      %p249 = pneg %p134
    $region51: #{tpu_custom_call.1} parent=1 // pred_check_branch
      %251 = sbr.rel (%p249) target = $region53
    $region52: #{tpu_custom_call.1} parent=1 // pred_region
      %v252 = vld [vmem:[#allocation2] sm:$0xff]
      %v254 = vcombine.high %v252, %v252
      %v256 = vunpack.c.l.s4 1983009808
      %v257 = vunpack.c.0.s8 %v256
      %v258 = vlaneseq
      %v259 = vshrl.u32 %v258, 7
      %v260 = vsub.s32 %v257, %v259
      %v261 = vrot.slane %v252, %v260
      %v263 = vunpack.c.l.s4 1983009808
      %v264 = vunpack.c.0.s8 %v263
      %v265 = vlaneseq
      %v266 = vshrl.u32 %v265, 7
      %v267 = vsub.s32 %v264, %v266
      %v268 = vrot.slane %v254, %v267
      %v269 = vcombine.high %v261, %v261
      %v270 = vcombine.high %v268, %v268
      %vm275 = vcmask 1041408
      %v276 = vsel %vm275, %v261, 0.0
      %v277 = vsel %vm275, %v269, 0.0
      %v278 = vadd.f32 %v276, %v277
      %v279 = vsel %vm275, %v268, 0.0
      %v280 = vadd.f32 %v278, %v279
      %v281 = vsel %vm275, %v270, 0.0
      %v282 = vadd.f32 %v280, %v281
      %283 = vadd.xlane.f32.xlu0 %v282
      %v284 = vpop.xlane.xlu0 %283
      %v285 = vrot.slane %v284, 4
      %v286 = vadd.f32 %v284, %v285
      %v287 = vrot.slane %v286, 2
      %v288 = vadd.f32 %v286, %v287
      %v289 = vrot.slane %v288, 1
      %v290 = vadd.f32 %v288, %v289
      %s291 = vtos %v290
      %s292 = smul.f32 %s291, 0.0009765625
      %v293 = vlaneseq
      %v294 = vshrl.u32 %v293, 7
      %v295 = vlaneseq
      %v296 = vand.u32 %v295, 127
      %vm297 = vcmp.eq.s32.totalorder %v294, 0
      %vm298 = vcmp.eq.s32.totalorder %v296, 0
      %vm299 = vmand %vm297, %vm298
      %v300 = vstv %s292
      %v301 = vsel %vm299, %v300, 0.0
      %302 = vst [vmem:[#allocation11] sm:$0xff] %v301
    $region53: #{tpu_custom_call.1} parent=1 // pred_fallthru
      _
    // Predicated region
    $region54: #{tpu_custom_call.1} parent=1 // pred_check
      _
    $region55: #{tpu_custom_call.1} parent=1 // pred_check_branch
      %304 = sbr.rel (0) target = $region57
    $region56: #{tpu_custom_call.1} parent=1 // pred_region
      %s306 = ssub.s32 128, 128
      %307 = vsyncadd [#allocation5], %s306
      %s309 = sshll.u32 [#allocation11], 4
      %s310 = int_to_ptr.vmem [resolvable:$true] %s309
      %312 = dma.vmem_to_hbm [thread:$0]  %s310, 128, %s5, [#allocation5]
    $region57: #{tpu_custom_call.1} parent=1 // pred_fallthru
      _
    // Predicated region
    $region58: #{tpu_custom_call.1} parent=1 // pred_check
      _
    $region59: #{tpu_custom_call.1} parent=1 // pred_check_branch
      %314 = sbr.rel (0) target = $region61
    $region60: #{tpu_custom_call.1} parent=1 // pred_region
      %315 = dma.done [#allocation5], 128
    $region61: #{tpu_custom_call.1} parent=1 // pred_fallthru
      _
    %316 = vsyncpa [#allocation4], 1
    %317 = vsyncpa [#allocation7], 1
    %318 = vsyncpa [#allocation10], 1
    %319 = vsyncpa [#allocation5], 1

</llo_original>
